<compile_context>
chip_gen: v7x
topology: tpu7x:2x2x1
jax: 0.10.0
libtpu: 0.0.40
codegen_flags: <defaults>
</compile_context>

<pallas_src>
import functools

import jax
import jax.numpy as jnp
from jax.experimental import pallas as pl
from jax.experimental.pallas import tpu as pltpu


def decoder_kernel(x_ref, w1_ref, b1_ref, gamma_ref, beta_ref,
                   wh_ref, bh_ref, pm_ref, pv_ref):
    tn = pm_ref.shape[1]

    # --- hidden layer: Linear -> BatchNorm1d(training stats) -> ReLU ---------
    # Recomputed at every grid step so the grid axis carries no state and can
    # be sharded ("parallel") across v7x's two TensorCores.
    h = jnp.dot(x_ref[...], w1_ref[...],
                preferred_element_type=jnp.float32) + b1_ref[...]
    mean = jnp.mean(h, axis=0, keepdims=True)
    centered = h - mean
    # Two-pass (centered) biased variance, eps=1e-3, all in f32.
    var = jnp.mean(centered * centered, axis=0, keepdims=True)
    scale = gamma_ref[...] * jax.lax.rsqrt(var + 1e-3)
    h_act = jnp.maximum(centered * scale + beta_ref[...], 0.0)      # ReLU
    h_bf = h_act.astype(jnp.bfloat16)

    # --- fused output heads: one MXU matmul covering [mean_tile | var_tile] --
    out = jnp.dot(h_bf, wh_ref[...],
                  preferred_element_type=jnp.float32) + bh_ref[...]
    pm_ref[...] = out[:, :tn]
    # exp(16*tanh(.)) kept in f32 (magnitudes up to ~8.9e6); EUP work overlaps
    # the next tile's weight DMA / matmul.
    pv_ref[...] = jnp.exp(16.0 * jnp.tanh(out[:, tn:]))


@functools.partial(jax.jit, static_argnames=("tile_n",))
def decoder_forward(x, params, tile_n=None):
    """x: [B, n_input] float32.  Returns (p_m, p_v), each [B, n_output]."""
    w1, b1, gamma, beta, wm, bm, wv, bv = params
    B, n_in = x.shape
    H = w1.shape[1]
    n_out = wm.shape[1]

    n_out_128 = 128 * ((n_out + 127) // 128)
    if tile_n is None:
        # VMEM-budgeted lane-dense tile (multiple of 128).  Per unit of tile_n
        # the kernel holds:
        #   head weights : 2 bufs * H * 2 heads * 2 B (bf16) = 8*H  bytes
        #   outputs      : 2 heads * 2 bufs * B * 4 B (f32)  = 16*B bytes
        # Budgeted to 32 MiB so the call fits v7x's 64 MiB VMEM with headroom.
        vmem_budget = 32 * 1024 * 1024
        const_bytes = 2 * 2 * (B * n_in + n_in * H) + 6 * 4 * H
        per_tn = 8 * H + 16 * B
        tn_cap = max(128, ((vmem_budget - const_bytes) // per_tn) // 128 * 128)
        tile_n = int(min(4096, tn_cap, n_out_128))
    n_tiles = (n_out + tile_n - 1) // tile_n
    n_out_pad = n_tiles * tile_n
    pad = n_out_pad - n_out

    # Block-major fused head weights: tile j is the contiguous slab
    #   w_heads[j] = [wm[:, j*TN:(j+1)*TN] | wv[:, j*TN:(j+1)*TN]]  of shape (H, 2*TN)
    # so each grid step's weight DMA is ONE contiguous region and both heads
    # cost a single MXU matmul per tile.
    wm_p = jnp.pad(wm, ((0, 0), (0, pad)))
    wv_p = jnp.pad(wv, ((0, 0), (0, pad)))
    bm_p = jnp.pad(bm, ((0, 0), (0, pad)))
    bv_p = jnp.pad(bv, ((0, 0), (0, pad)))
    wm_t = wm_p.reshape(H, n_tiles, tile_n).transpose(1, 0, 2)   # (T, H, TN)
    wv_t = wv_p.reshape(H, n_tiles, tile_n).transpose(1, 0, 2)
    w_heads = jnp.concatenate([wm_t, wv_t], axis=-1)             # (T, H, 2*TN)
    b_heads = jnp.concatenate([bm_p.reshape(n_tiles, 1, tile_n),
                               bv_p.reshape(n_tiles, 1, tile_n)],
                              axis=-1)                           # (T, 1, 2*TN)

    # bf16 MXU inputs (f32 accumulation inside the kernel); halves weight bytes.
    x_bf = x.astype(jnp.bfloat16)
    w1_bf = w1.astype(jnp.bfloat16)
    wh_bf = w_heads.astype(jnp.bfloat16)

    flops = n_tiles * 2 * B * n_in * H + 2 * B * H * (2 * n_out_pad)
    transcendentals = 2 * B * n_out_pad + n_tiles * H   # tanh+exp per var elem, rsqrt
    bytes_accessed = (2 * (x_bf.size + n_tiles * w1_bf.size + wh_bf.size)
                      + 4 * (n_tiles * (b1.size + gamma.size + beta.size)
                             + b_heads.size)
                      + 4 * 2 * B * n_out_pad)

    def const_spec(shape):
        return pl.BlockSpec(shape, lambda j: (0, 0))

    grid_spec = pltpu.PrefetchScalarGridSpec(
        num_scalar_prefetch=0,
        grid=(n_tiles,),
        in_specs=[
            const_spec((B, n_in)),                                     # x (bf16)
            const_spec((n_in, H)),                                     # w1 (bf16)
            const_spec((1, H)),                                        # b1
            const_spec((1, H)),                                        # gamma
            const_spec((1, H)),                                        # beta
            pl.BlockSpec((None, H, 2 * tile_n), lambda j: (j, 0, 0)),  # fused head W
            pl.BlockSpec((None, 1, 2 * tile_n), lambda j: (j, 0, 0)),  # fused head b
        ],
        out_specs=[
            pl.BlockSpec((B, tile_n), lambda j: (0, j)),               # p_m (padded)
            pl.BlockSpec((B, tile_n), lambda j: (0, j)),               # p_v (padded)
        ],
    )

    pm_pad, pv_pad = pl.pallas_call(
        decoder_kernel,
        out_shape=(jax.ShapeDtypeStruct((B, n_out_pad), jnp.float32),
                   jax.ShapeDtypeStruct((B, n_out_pad), jnp.float32)),
        grid_spec=grid_spec,
        compiler_params=pltpu.CompilerParams(
            dimension_semantics=("parallel",),
            vmem_limit_bytes=48 * 1024 * 1024),
        cost_estimate=pl.CostEstimate(flops=flops,
                                      transcendentals=transcendentals,
                                      bytes_accessed=bytes_accessed),
    )(x_bf, w1_bf, b1, gamma, beta, wh_bf, b_heads)

    return pm_pad[:, :n_out], pv_pad[:, :n_out]


def init_params(key, n_input, n_hidden, n_output):
    """Deterministic synthetic parameters, PyTorch-Linear-style uniform init."""
    ks = jax.random.split(key, 6)

    def linear_init(kw, kb, fan_in, fan_out):
        bound = 1.0 / jnp.sqrt(jnp.float32(fan_in))
        w = jax.random.uniform(kw, (fan_in, fan_out), jnp.float32, -bound, bound)
        b = jax.random.uniform(kb, (1, fan_out), jnp.float32, -bound, bound)
        return w, b

    w1, b1 = linear_init(ks[0], ks[1], n_input, n_hidden)
    wm, bm = linear_init(ks[2], ks[3], n_hidden, n_output)
    wv, bv = linear_init(ks[4], ks[5], n_hidden, n_output)
    gamma = jnp.ones((1, n_hidden), jnp.float32)   # BatchNorm weight
    beta = jnp.zeros((1, n_hidden), jnp.float32)   # BatchNorm bias
    return (w1, b1, gamma, beta, wm, bm, wv, bv)


def reference_forward(x, params, mxu_dtype=jnp.float32):
    """Pure-JAX reference.  mxu_dtype=bf16 mirrors the kernel's MXU precision."""
    w1, b1, gamma, beta, wm, bm, wv, bv = params
    c = lambda a: a.astype(mxu_dtype)
    h = jnp.dot(c(x), c(w1), preferred_element_type=jnp.float32) + b1
    mean = jnp.mean(h, axis=0, keepdims=True)
    centered = h - mean
    var = jnp.mean(centered * centered, axis=0, keepdims=True)
    scale = gamma * jax.lax.rsqrt(var + 1e-3)
    h = jnp.maximum(centered * scale + beta, 0.0)
    hq = c(h)
    pm = jnp.dot(hq, c(wm), preferred_element_type=jnp.float32) + bm
    pv = jnp.dot(hq, c(wv), preferred_element_type=jnp.float32) + bv
    return pm, jnp.exp(16.0 * jnp.tanh(pv))


if __name__ == "__main__":
    n_input, n_hidden, n_output, batch = 32, 128, 32, 8

    key = jax.random.PRNGKey(0)
    k_x, k_p = jax.random.split(key)
    x = jax.random.normal(k_x, (batch, n_input), dtype=jnp.float32)
    params = init_params(k_p, n_input, n_hidden, n_output)

    p_m, p_v = decoder_forward(x, params)
    jax.block_until_ready((p_m, p_v))

    # Tight check vs a reference that mirrors the kernel's bf16 MXU precision.
    rm_b, rv_b = reference_forward(x, params, mxu_dtype=jnp.bfloat16)
    assert jnp.allclose(p_m, rm_b, atol=3e-3, rtol=3e-3)
    assert jnp.allclose(jnp.log(p_v), jnp.log(rv_b), atol=3e-2)

    # Relaxed check vs the pure-f32 reference (bf16 MXU rounding; the
    # exp(16*tanh(.)) epilogue amplifies tiny logit errors, so compare logs).
    rm, rv = reference_forward(x, params)
    assert jnp.allclose(p_m, rm, atol=5e-2, rtol=5e-2)
    assert jnp.allclose(jnp.log(p_v), jnp.log(rv), atol=0.5)

    print("KERNEL_OK")
</pallas_src>

<mosaic_0001>
module attributes {stable_mosaic.version = 11 : i64} {
  func.func @decoder_kernel(%arg0: i32, %arg1: memref<8x32xbf16, #tpu.memory_space<vmem>>, %arg2: memref<32x128xbf16, #tpu.memory_space<vmem>>, %arg3: memref<1x128xf32, #tpu.memory_space<vmem>>, %arg4: memref<1x128xf32, #tpu.memory_space<vmem>>, %arg5: memref<1x128xf32, #tpu.memory_space<vmem>>, %arg6: memref<1x128x256xbf16, #tpu.memory_space<vmem>>, %arg7: memref<1x1x256xf32, #tpu.memory_space<vmem>>, %arg8: memref<8x128xf32, #tpu.memory_space<vmem>>, %arg9: memref<8x128xf32, #tpu.memory_space<vmem>>) attributes {dimension_semantics = [#tpu.dimension_semantics<parallel>], iteration_bounds = array<i64: 1>, scalar_prefetch = 0 : i64, scratch_operands = 0 : i64, tpu.core_type = #tpu.core_type<tc>, window_params = [{pipeline_mode = #tpu.pipeline_mode<synchronous>, transform_indices = @transform_0, window_bounds = array<i64: 8, 32>}, {pipeline_mode = #tpu.pipeline_mode<synchronous>, transform_indices = @transform_1, window_bounds = array<i64: 32, 128>}, {pipeline_mode = #tpu.pipeline_mode<synchronous>, transform_indices = @transform_2, window_bounds = array<i64: 1, 128>}, {pipeline_mode = #tpu.pipeline_mode<synchronous>, transform_indices = @transform_3, window_bounds = array<i64: 1, 128>}, {pipeline_mode = #tpu.pipeline_mode<synchronous>, transform_indices = @transform_4, window_bounds = array<i64: 1, 128>}, {transform_indices = @transform_5, window_bounds = array<i64: 1, 128, 256>}, {transform_indices = @transform_6, window_bounds = array<i64: 1, 1, 256>}, {transform_indices = @transform_7, window_bounds = array<i64: 8, 128>}, {transform_indices = @transform_8, window_bounds = array<i64: 8, 128>}]} {
    %c0 = arith.constant 0 : index
    %c0_0 = arith.constant 0 : index
    %0 = vector.load %arg1[%c0, %c0_0] : memref<8x32xbf16, #tpu.memory_space<vmem>>, vector<8x32xbf16>
    %c0_1 = arith.constant 0 : index
    %c0_2 = arith.constant 0 : index
    %1 = vector.load %arg2[%c0_1, %c0_2] : memref<32x128xbf16, #tpu.memory_space<vmem>>, vector<32x128xbf16>
    %cst = arith.constant dense<0.000000e+00> : vector<8x128xf32>
    %2 = tpu.matmul %0, %1, %cst {dimension_numbers = #tpu.dot_dimension_numbers<[1], [0], [0], [1], [0, 0, 1, 1], [], []>} : vector<8x32xbf16>, vector<32x128xbf16>, vector<8x128xf32> -> vector<8x128xf32>
    %c0_3 = arith.constant 0 : index
    %c0_4 = arith.constant 0 : index
    %3 = vector.load %arg3[%c0_3, %c0_4] : memref<1x128xf32, #tpu.memory_space<vmem>>, vector<1x128xf32>
    %4 = vector.broadcast %3 : vector<1x128xf32> to vector<8x128xf32>
    %5 = arith.addf %2, %4 : vector<8x128xf32>
    %cst_5 = arith.constant dense<0.000000e+00> : vector<128xf32>
    %6 = vector.multi_reduction <add>, %5, %cst_5 [0] : vector<8x128xf32> to vector<128xf32>
    %7 = vector.shape_cast %6 : vector<128xf32> to vector<1x128xf32>
    %cst_6 = arith.constant 8.000000e+00 : f32
    %8 = vector.broadcast %cst_6 : f32 to vector<1x128xf32>
    %9 = arith.divf %7, %8 : vector<1x128xf32>
    %10 = vector.broadcast %9 : vector<1x128xf32> to vector<8x128xf32>
    %11 = arith.subf %5, %10 : vector<8x128xf32>
    %12 = arith.mulf %11, %11 : vector<8x128xf32>
    %cst_7 = arith.constant dense<0.000000e+00> : vector<128xf32>
    %13 = vector.multi_reduction <add>, %12, %cst_7 [0] : vector<8x128xf32> to vector<128xf32>
    %14 = vector.shape_cast %13 : vector<128xf32> to vector<1x128xf32>
    %cst_8 = arith.constant 8.000000e+00 : f32
    %15 = vector.broadcast %cst_8 : f32 to vector<1x128xf32>
    %16 = arith.divf %14, %15 : vector<1x128xf32>
    %c0_9 = arith.constant 0 : index
    %c0_10 = arith.constant 0 : index
    %17 = vector.load %arg4[%c0_9, %c0_10] : memref<1x128xf32, #tpu.memory_space<vmem>>, vector<1x128xf32>
    %cst_11 = arith.constant 1.000000e-03 : f32
    %18 = vector.broadcast %cst_11 : f32 to vector<1x128xf32>
    %19 = arith.addf %16, %18 : vector<1x128xf32>
    %20 = math.rsqrt %19 : vector<1x128xf32>
    %21 = arith.mulf %17, %20 : vector<1x128xf32>
    %22 = vector.broadcast %21 : vector<1x128xf32> to vector<8x128xf32>
    %23 = arith.mulf %11, %22 : vector<8x128xf32>
    %c0_12 = arith.constant 0 : index
    %c0_13 = arith.constant 0 : index
    %24 = vector.load %arg5[%c0_12, %c0_13] : memref<1x128xf32, #tpu.memory_space<vmem>>, vector<1x128xf32>
    %25 = vector.broadcast %24 : vector<1x128xf32> to vector<8x128xf32>
    %26 = arith.addf %23, %25 : vector<8x128xf32>
    %cst_14 = arith.constant 0.000000e+00 : f32
    %27 = vector.broadcast %cst_14 : f32 to vector<8x128xf32>
    %28 = arith.maximumf %26, %27 : vector<8x128xf32>
    %29 = arith.truncf %28 : vector<8x128xf32> to vector<8x128xbf16>
    %c0_15 = arith.constant 0 : index
    %c0_16 = arith.constant 0 : index
    %c0_17 = arith.constant 0 : index
    %30 = vector.load %arg6[%c0_15, %c0_16, %c0_17] : memref<1x128x256xbf16, #tpu.memory_space<vmem>>, vector<1x128x256xbf16>
    %31 = vector.shape_cast %30 : vector<1x128x256xbf16> to vector<128x256xbf16>
    %cst_18 = arith.constant dense<0.000000e+00> : vector<8x256xf32>
    %32 = tpu.matmul %29, %31, %cst_18 {dimension_numbers = #tpu.dot_dimension_numbers<[1], [0], [0], [1], [0, 0, 1, 1], [], []>} : vector<8x128xbf16>, vector<128x256xbf16>, vector<8x256xf32> -> vector<8x256xf32>
    %c0_19 = arith.constant 0 : index
    %c0_20 = arith.constant 0 : index
    %c0_21 = arith.constant 0 : index
    %33 = vector.load %arg7[%c0_19, %c0_20, %c0_21] : memref<1x1x256xf32, #tpu.memory_space<vmem>>, vector<1x1x256xf32>
    %34 = vector.shape_cast %33 : vector<1x1x256xf32> to vector<1x256xf32>
    %35 = vector.broadcast %34 : vector<1x256xf32> to vector<8x256xf32>
    %36 = arith.addf %32, %35 : vector<8x256xf32>
    %37 = vector.extract_strided_slice %36 {offsets = [0, 0], sizes = [8, 128], strides = [1, 1]} : vector<8x256xf32> to vector<8x128xf32>
    %c0_22 = arith.constant 0 : index
    %c0_23 = arith.constant 0 : index
    %38 = vector.load %arg8[%c0_22, %c0_23] : memref<8x128xf32, #tpu.memory_space<vmem>>, vector<8x128xf32>
    tpu.vector_store %arg8[%c0_22, %c0_23], %37 {strides = array<i32>} : memref<8x128xf32, #tpu.memory_space<vmem>>, vector<8x128xf32>,
    %39 = vector.extract_strided_slice %36 {offsets = [0, 128], sizes = [8, 128], strides = [1, 1]} : vector<8x256xf32> to vector<8x128xf32>
    %40 = math.tanh %39 : vector<8x128xf32>
    %cst_24 = arith.constant 1.600000e+01 : f32
    %41 = vector.broadcast %cst_24 : f32 to vector<8x128xf32>
    %42 = arith.mulf %41, %40 : vector<8x128xf32>
    %43 = math.exp %42 : vector<8x128xf32>
    %c0_25 = arith.constant 0 : index
    %c0_26 = arith.constant 0 : index
    %44 = vector.load %arg9[%c0_25, %c0_26] : memref<8x128xf32, #tpu.memory_space<vmem>>, vector<8x128xf32>
    tpu.vector_store %arg9[%c0_25, %c0_26], %43 {strides = array<i32>} : memref<8x128xf32, #tpu.memory_space<vmem>>, vector<8x128xf32>,
    return
  }
  func.func @transform_0(%arg0: i32) -> (i32, i32) {
    %c0_i32 = arith.constant 0 : i32
    %c0_i32_0 = arith.constant 0 : i32
    %c0_i32_1 = arith.constant 0 : i32
    return %c0_i32, %c0_i32_0 : i32, i32
  }
  func.func @transform_1(%arg0: i32) -> (i32, i32) {
    %c0_i32 = arith.constant 0 : i32
    %c0_i32_0 = arith.constant 0 : i32
    %c0_i32_1 = arith.constant 0 : i32
    return %c0_i32, %c0_i32_0 : i32, i32
  }
  func.func @transform_2(%arg0: i32) -> (i32, i32) {
    %c0_i32 = arith.constant 0 : i32
    %c0_i32_0 = arith.constant 0 : i32
    %c0_i32_1 = arith.constant 0 : i32
    return %c0_i32, %c0_i32_0 : i32, i32
  }
  func.func @transform_3(%arg0: i32) -> (i32, i32) {
    %c0_i32 = arith.constant 0 : i32
    %c0_i32_0 = arith.constant 0 : i32
    %c0_i32_1 = arith.constant 0 : i32
    return %c0_i32, %c0_i32_0 : i32, i32
  }
  func.func @transform_4(%arg0: i32) -> (i32, i32) {
    %c0_i32 = arith.constant 0 : i32
    %c0_i32_0 = arith.constant 0 : i32
    %c0_i32_1 = arith.constant 0 : i32
    return %c0_i32, %c0_i32_0 : i32, i32
  }
  func.func @transform_5(%arg0: i32) -> (i32, i32, i32) {
    %c0_i32 = arith.constant 0 : i32
    %c0_i32_0 = arith.constant 0 : i32
    %c0_i32_1 = arith.constant 0 : i32
    return %arg0, %c0_i32, %c0_i32_0 : i32, i32, i32
  }
  func.func @transform_6(%arg0: i32) -> (i32, i32, i32) {
    %c0_i32 = arith.constant 0 : i32
    %c0_i32_0 = arith.constant 0 : i32
    %c0_i32_1 = arith.constant 0 : i32
    return %arg0, %c0_i32, %c0_i32_0 : i32, i32, i32
  }
  func.func @transform_7(%arg0: i32) -> (i32, i32) {
    %c0_i32 = arith.constant 0 : i32
    %c0_i32_0 = arith.constant 0 : i32
    return %c0_i32, %arg0 : i32, i32
  }
  func.func @transform_8(%arg0: i32) -> (i32, i32) {
    %c0_i32 = arith.constant 0 : i32
    %c0_i32_0 = arith.constant 0 : i32
    return %c0_i32, %arg0 : i32, i32
  }
}

</mosaic_0001>

<llo_original>
// kernel: decoder_forward.1
$region0: #{decoder_forward.1}
  #allocation0 [shape = 'u32[]', space=smem, size = 0x4, offset = 0x4, fixed_abs, tag = 'smem constant byte address 0x4 - core index']
  #allocation1 [shape = 'u32[144,128]{1,0:T(1,128)}', space=vmem, size = 0x12000, scoped, tag = 'internal scratch']
  %s0 = inlined_call_operand.vmem [shape: bf16[8,32], index: 0, kind: input, shape index: {}]
  %s1 = inlined_call_operand.vmem [shape: bf16[32,128], index: 1, kind: input, shape index: {}]
  %s2 = inlined_call_operand.vmem [shape: f32[1,128], index: 2, kind: input, shape index: {}]
  %s3 = inlined_call_operand.vmem [shape: f32[1,128], index: 3, kind: input, shape index: {}]
  %s4 = inlined_call_operand.vmem [shape: f32[1,128], index: 4, kind: input, shape index: {}]
  %s5 = inlined_call_operand.vmem [shape: bf16[1,128,256], index: 5, kind: input, shape index: {}]
  %s6 = inlined_call_operand.vmem [shape: f32[1,1,256], index: 6, kind: input, shape index: {}]
  %s7 = inlined_call_operand.hbm [shape: f32[8,128], index: 7, kind: output, shape index: {0}]
  %s8 = inlined_call_operand.hbm [shape: f32[8,128], index: 8, kind: output, shape index: {1}]
  %9 = xla_tuple %s7, %s8
  %s10 = sld [smem:[#allocation0]]
  $region46: #{decoder_forward.1} parent=0
    _
  %s12 = ssub.s32 1, %s10
  %s13 = scalar_select 0, %s12, %s10
  $region1: #{decoder_forward.1} parent=0
    #allocation2 [shape = 'u8[4096]{0}', space=vmem, size = 0x1000, scoped, tag = 'output window, operand 0, single buffered']
    #allocation3 [shape = 's32[1]{0}', space=sflag, size = 0x4, scoped, tag = 'scoped memory for decoder_forward.1']
    #allocation4 [shape = 'u8[4096]{0}', space=vmem, size = 0x1000, scoped, tag = 'output window, operand 1, single buffered']
    #allocation5 [shape = 's32[1]{0}', space=sflag, size = 0x4, scoped, tag = 'scoped memory for decoder_forward.1']
    %14 = vsyncpa [#allocation3], 0
    %15 = vsyncpa [#allocation5], 0
    // Predicated region
    $region2: #{decoder_forward.1} parent=1 // pred_check
      _
    $region3: #{decoder_forward.1} parent=1 // pred_check_branch
      %17 = sbr.rel (0) target = $region5
    $region4: #{decoder_forward.1} parent=1 // pred_region
      _
    $region5: #{decoder_forward.1} parent=1 // pred_fallthru
      _
    // Predicated region
    $region6: #{decoder_forward.1} parent=1 // pred_check
      _
    $region7: #{decoder_forward.1} parent=1 // pred_check_branch
      %19 = sbr.rel (0) target = $region9
    $region8: #{decoder_forward.1} parent=1 // pred_region
      _
    $region9: #{decoder_forward.1} parent=1 // pred_fallthru
      _
    // Predicated region
    $region10: #{decoder_forward.1} parent=1 // pred_check
      _
    $region11: #{decoder_forward.1} parent=1 // pred_check_branch
      %21 = sbr.rel (0) target = $region13
    $region12: #{decoder_forward.1} parent=1 // pred_region
      _
    $region13: #{decoder_forward.1} parent=1 // pred_fallthru
      _
    // Predicated region
    $region14: #{decoder_forward.1} parent=1 // pred_check
      _
    $region15: #{decoder_forward.1} parent=1 // pred_check_branch
      %23 = sbr.rel (0) target = $region17
    $region16: #{decoder_forward.1} parent=1 // pred_region
      _
    $region17: #{decoder_forward.1} parent=1 // pred_fallthru
      _
    // Predicated region
    $region18: #{decoder_forward.1} parent=1 // pred_check
      _
    $region19: #{decoder_forward.1} parent=1 // pred_check_branch
      %25 = sbr.rel (0) target = $region21
    $region20: #{decoder_forward.1} parent=1 // pred_region
      _
    $region21: #{decoder_forward.1} parent=1 // pred_fallthru
      _
    // Predicated region
    $region22: #{decoder_forward.1} parent=1 // pred_check
      _
    $region23: #{decoder_forward.1} parent=1 // pred_check_branch
      %27 = sbr.rel (0) target = $region25
    $region24: #{decoder_forward.1} parent=1 // pred_region
      _
    $region25: #{decoder_forward.1} parent=1 // pred_fallthru
      _
    // Predicated region
    $region26: #{decoder_forward.1} parent=1 // pred_check
      _
    $region27: #{decoder_forward.1} parent=1 // pred_check_branch
      %29 = sbr.rel (0) target = $region29
    $region28: #{decoder_forward.1} parent=1 // pred_region
      _
    $region29: #{decoder_forward.1} parent=1 // pred_fallthru
      _
    %v31 = vld [vmem:[%s0] sm:$0xf]
    %v32 = vld [vmem:[%s1] sm:$0xf]
    %v33 = vld [vmem:[%s1 + $0x4] sm:$0xf]
    %v34 = vld [vmem:[%s1 + $0x8] sm:$0xf]
    %v35 = vld [vmem:[%s1 + $0xc] sm:$0xf]
    %v36 = vld [vmem:[%s2] sm:$0x1]
    %v38 = vlaneseq
    %v39 = vshrl.u32 %v38, 7
    %v40 = vsub.s32 0, %v39
    %v41 = vrot.slane %v36, %v40
    %v47 = vunpack.c.l.b16 %v32
    %v48 = vunpack.c.l.b16 %v33
    %v49 = vunpack.c.l.b16 %v34
    %v50 = vunpack.c.l.b16 %v35
    %v51 = vpack.c.b16 %v48, %v47
    %v52 = vpack.c.b16 %v50, %v49
    %vm55 = vcmask 261120
    %v57 = vsel %vm55, %v31, 0
    %59 = vmatprep.subr.bf16.mxu0 0
    %60 = vmatpush1.bf16.msra.mxu0 %v51
    %61 = vmatprep.subr.bf16.mxu0 0
    %62 = vmatpush1.bf16.msra.mxu0 %v52
    %63 = vmatprep.subr.bf16.mxu0 0
    %64 = vmatpush1.bf16.msra.mxu0 0
    %65 = vmatprep.subr.bf16.mxu0 0
    %66 = vmatpush1.bf16.msra.mxu0 0
    %67 = vmatprep.subr.bf16.mxu0 0
    %68 = vmatpush1.bf16.msra.mxu0 0
    %69 = vmatprep.subr.bf16.mxu0 0
    %70 = vmatpush1.bf16.msra.mxu0 0
    %71 = vmatprep.subr.bf16.mxu0 0
    %72 = vmatpush1.bf16.msra.mxu0 0
    %73 = vmatprep.subr.bf16.mxu0 0
    %74 = vmatpush1.bf16.msra.mxu0 0
    %75 = vmatprep.subr.bf16.mxu0 0
    %76 = vmatpush1.bf16.msra.mxu0 0
    %77 = vmatprep.subr.bf16.mxu0 0
    %78 = vmatpush1.bf16.msra.mxu0 0
    %79 = vmatprep.subr.bf16.mxu0 0
    %80 = vmatpush1.bf16.msra.mxu0 0
    %81 = vmatprep.subr.bf16.mxu0 0
    %82 = vmatpush1.bf16.msra.mxu0 0
    %83 = vmatprep.subr.bf16.mxu0 0
    %84 = vmatpush1.bf16.msra.mxu0 0
    %85 = vmatprep.subr.bf16.mxu0 0
    %86 = vmatpush1.bf16.msra.mxu0 0
    %87 = vmatprep.subr.bf16.mxu0 0
    %88 = vmatpush1.bf16.msra.mxu0 0
    %89 = vmatprep.subr.bf16.mxu0 0
    %90 = vmatpush1.bf16.msra.mxu0 0
    %91 = vmatprep.mubr.bf16.mxu0 0
    %92 = vmatmul.mubr.bf16.gmra.mrb[0].mxu0 %v57
    %v93 = vpop.f32.mrb[0].mxu0
    %v94 = vadd.f32 %v41, %v93
    %v95 = vpop.f32.mrb[0].mxu0
    %v96 = vpop.f32.mrb[0].mxu0
    %v97 = vpop.f32.mrb[0].mxu0
    %98 = vdwg.mxu0
    %v99 = vrot.slane %v94, 4
    %v100 = vadd.f32 %v94, %v99
    %v101 = vrot.slane %v100, 2
    %v102 = vadd.f32 %v100, %v101
    %v103 = vrot.slane %v102, 1
    %v104 = vadd.f32 %v102, %v103
    %v105 = vrcp.pop 8.0
    %v106 = vmul.f32 %v104, %v105
    %v107 = vsub.f32 %v94, %v106
    %v108 = vmul.f32 %v107, %v107
    %v109 = vrot.slane %v108, 4
    %v110 = vadd.f32 %v108, %v109
    %v111 = vrot.slane %v110, 2
    %v112 = vadd.f32 %v110, %v111
    %v113 = vrot.slane %v112, 1
    %v114 = vadd.f32 %v112, %v113
    %v115 = vmul.f32 %v114, %v105
    %v116 = vld [vmem:[%s3] sm:$0x1]
    %v117 = vadd.f32 %v115, 0.001
    %v118 = vrsqrt.pop %v117
    %v119 = vmul.f32 %v116, %v118
    %v121 = vlaneseq
    %v122 = vshrl.u32 %v121, 7
    %v123 = vsub.s32 0, %v122
    %v124 = vrot.slane %v119, %v123
    %v126 = vmul.f32 %v107, %v124
    %v127 = vld [vmem:[%s4] sm:$0x1]
    %v129 = vlaneseq
    %v130 = vshrl.u32 %v129, 7
    %v131 = vsub.s32 0, %v130
    %v132 = vrot.slane %v127, %v131
    %v134 = vadd.f32 %v126, %v132
    %v135 = vmax.f32 %v134, 0.0
    %v136 = vpack.c.bf16 %v135, %v135
    %v137 = vld [vmem:[%s5] sm:$0xff]
    %v138 = vld [vmem:[%s5 + $0x8] sm:$0xff]
    %v139 = vld [vmem:[%s5 + $0x10] sm:$0xff]
    %v140 = vld [vmem:[%s5 + $0x18] sm:$0xff]
    %v141 = vld [vmem:[%s5 + $0x20] sm:$0xff]
    %v142 = vld [vmem:[%s5 + $0x28] sm:$0xff]
    %v143 = vld [vmem:[%s5 + $0x30] sm:$0xff]
    %v144 = vld [vmem:[%s5 + $0x38] sm:$0xff]
    %v145 = vld [vmem:[%s5 + $0x40] sm:$0xff]
    %v146 = vld [vmem:[%s5 + $0x48] sm:$0xff]
    %v147 = vld [vmem:[%s5 + $0x50] sm:$0xff]
    %v148 = vld [vmem:[%s5 + $0x58] sm:$0xff]
    %v149 = vld [vmem:[%s5 + $0x60] sm:$0xff]
    %v150 = vld [vmem:[%s5 + $0x68] sm:$0xff]
    %v151 = vld [vmem:[%s5 + $0x70] sm:$0xff]
    %v152 = vld [vmem:[%s5 + $0x78] sm:$0xff]
    %v153 = vld [vmem:[%s6] sm:$0x3]
    %v155 = vlaneseq
    %v156 = vshrl.u32 %v155, 7
    %v157 = vsub.s32 0, %v156
    %v158 = vrot.slane %v153, %v157
    %v159 = vlaneseq
    %v160 = vshrl.u32 %v159, 7
    %v161 = vsub.s32 1, %v160
    %v162 = vrot.slane %v153, %v161
    %v181 = vunpack.c.l.b16 %v137
    %v182 = vunpack.c.h.b16 %v137
    %v183 = vunpack.c.l.b16 %v138
    %v184 = vunpack.c.h.b16 %v138
    %v185 = vunpack.c.l.b16 %v139
    %v186 = vunpack.c.h.b16 %v139
    %v187 = vunpack.c.l.b16 %v140
    %v188 = vunpack.c.h.b16 %v140
    %v189 = vunpack.c.l.b16 %v141
    %v190 = vunpack.c.h.b16 %v141
    %v191 = vunpack.c.l.b16 %v142
    %v192 = vunpack.c.h.b16 %v142
    %v193 = vunpack.c.l.b16 %v143
    %v194 = vunpack.c.h.b16 %v143
    %v195 = vunpack.c.l.b16 %v144
    %v196 = vunpack.c.h.b16 %v144
    %v197 = vunpack.c.l.b16 %v145
    %v198 = vunpack.c.h.b16 %v145
    %v199 = vunpack.c.l.b16 %v146
    %v200 = vunpack.c.h.b16 %v146
    %v201 = vunpack.c.l.b16 %v147
    %v202 = vunpack.c.h.b16 %v147
    %v203 = vunpack.c.l.b16 %v148
    %v204 = vunpack.c.h.b16 %v148
    %v205 = vunpack.c.l.b16 %v149
    %v206 = vunpack.c.h.b16 %v149
    %v207 = vunpack.c.l.b16 %v150
    %v208 = vunpack.c.h.b16 %v150
    %v209 = vunpack.c.l.b16 %v151
    %v210 = vunpack.c.h.b16 %v151
    %v211 = vunpack.c.l.b16 %v152
    %v212 = vunpack.c.h.b16 %v152
    %v213 = vpack.c.b16 %v183, %v181
    %v214 = vpack.c.b16 %v184, %v182
    %v215 = vpack.c.b16 %v187, %v185
    %v216 = vpack.c.b16 %v188, %v186
    %v217 = vpack.c.b16 %v191, %v189
    %v218 = vpack.c.b16 %v192, %v190
    %v219 = vpack.c.b16 %v195, %v193
    %v220 = vpack.c.b16 %v196, %v194
    %v221 = vpack.c.b16 %v199, %v197
    %v222 = vpack.c.b16 %v200, %v198
    %v223 = vpack.c.b16 %v203, %v201
    %v224 = vpack.c.b16 %v204, %v202
    %v225 = vpack.c.b16 %v207, %v205
    %v226 = vpack.c.b16 %v208, %v206
    %v227 = vpack.c.b16 %v211, %v209
    %v228 = vpack.c.b16 %v212, %v210
    %245 = vmatprep.subr.bf16.mxu0 %v214
    %246 = vmatpush1.bf16.msra.mxu0 %v213
    %247 = vmatprep.subr.bf16.mxu0 %v216
    %248 = vmatpush1.bf16.msra.mxu0 %v215
    %249 = vmatprep.subr.bf16.mxu0 %v218
    %250 = vmatpush1.bf16.msra.mxu0 %v217
    %251 = vmatprep.subr.bf16.mxu0 %v220
    %252 = vmatpush1.bf16.msra.mxu0 %v219
    %253 = vmatprep.subr.bf16.mxu0 %v222
    %254 = vmatpush1.bf16.msra.mxu0 %v221
    %255 = vmatprep.subr.bf16.mxu0 %v224
    %256 = vmatpush1.bf16.msra.mxu0 %v223
    %257 = vmatprep.subr.bf16.mxu0 %v226
    %258 = vmatpush1.bf16.msra.mxu0 %v225
    %259 = vmatprep.subr.bf16.mxu0 %v228
    %260 = vmatpush1.bf16.msra.mxu0 %v227
    %261 = vmatprep.subr.bf16.mxu0 0
    %262 = vmatpush1.bf16.msra.mxu0 0
    %263 = vmatprep.subr.bf16.mxu0 0
    %264 = vmatpush1.bf16.msra.mxu0 0
    %265 = vmatprep.subr.bf16.mxu0 0
    %266 = vmatpush1.bf16.msra.mxu0 0
    %267 = vmatprep.subr.bf16.mxu0 0
    %268 = vmatpush1.bf16.msra.mxu0 0
    %269 = vmatprep.subr.bf16.mxu0 0
    %270 = vmatpush1.bf16.msra.mxu0 0
    %271 = vmatprep.subr.bf16.mxu0 0
    %272 = vmatpush1.bf16.msra.mxu0 0
    %273 = vmatprep.subr.bf16.mxu0 0
    %274 = vmatpush1.bf16.msra.mxu0 0
    %275 = vmatprep.subr.bf16.mxu0 0
    %276 = vmatpush1.bf16.msra.mxu0 0
    %277 = vmatprep.mubr.bf16.mxu0 0
    %278 = vmatmul.mubr.bf16.gmra.mrb[0].mxu0 %v136
    %v279 = vpop.f32.mrb[0].mxu0
    %v280 = vadd.f32 %v158, %v279
    %v281 = vpop.f32.mrb[0].mxu0
    %v282 = vadd.f32 %v162, %v281
    %v283 = vpop.f32.mrb[0].mxu0
    %v284 = vpop.f32.mrb[0].mxu0
    %285 = vdwg.mxu0
    %286 = vst [vmem:[#allocation2] sm:$0xff] %v280
    %v287 = vtanh.pop %v282
    %v288 = vmul.f32 %v287, 16.0
    %v289 = vmul.f32 %v288, 1.442695
    %v290 = vpow.pop %v289
    %291 = vst [vmem:[#allocation4] sm:$0xff] %v290
    // Predicated region
    $region30: #{decoder_forward.1} parent=1 // pred_check
      _
    $region31: #{decoder_forward.1} parent=1 // pred_check_branch
      %293 = sbr.rel (0) target = $region33
    $region32: #{decoder_forward.1} parent=1 // pred_region
      %s295 = ssub.s32 128, 128
      %296 = vsyncadd [#allocation3], %s295
      %s298 = sshll.u32 [#allocation2], 4
      %s299 = int_to_ptr.vmem [resolvable:$true] %s298
      %301 = dma.vmem_to_hbm [thread:$0]  %s299, 128, %s7, [#allocation3]
    $region33: #{decoder_forward.1} parent=1 // pred_fallthru
      _
    // Predicated region
    $region34: #{decoder_forward.1} parent=1 // pred_check
      _
    $region35: #{decoder_forward.1} parent=1 // pred_check_branch
      %303 = sbr.rel (0) target = $region37
    $region36: #{decoder_forward.1} parent=1 // pred_region
      %s305 = ssub.s32 128, 128
      %306 = vsyncadd [#allocation5], %s305
      %s308 = sshll.u32 [#allocation4], 4
      %s309 = int_to_ptr.vmem [resolvable:$true] %s308
      %311 = dma.vmem_to_hbm [thread:$0]  %s309, 128, %s8, [#allocation5]
    $region37: #{decoder_forward.1} parent=1 // pred_fallthru
      _
    // Predicated region
    $region38: #{decoder_forward.1} parent=1 // pred_check
      _
    $region39: #{decoder_forward.1} parent=1 // pred_check_branch
      %313 = sbr.rel (0) target = $region41
    $region40: #{decoder_forward.1} parent=1 // pred_region
      %314 = dma.done [#allocation3], 128
    $region41: #{decoder_forward.1} parent=1 // pred_fallthru
      _
    // Predicated region
    $region42: #{decoder_forward.1} parent=1 // pred_check
      _
    $region43: #{decoder_forward.1} parent=1 // pred_check_branch
      %316 = sbr.rel (0) target = $region45
    $region44: #{decoder_forward.1} parent=1 // pred_region
      %317 = dma.done [#allocation5], 128
    $region45: #{decoder_forward.1} parent=1 // pred_fallthru
      _
    %318 = vsyncpa [#allocation3], 1
    %319 = vsyncpa [#allocation5], 1

</llo_original>
